<compile_context>
chip_gen: v7x
topology: tpu7x:2x2x1
jax: 0.10.0
libtpu: 0.0.40
codegen_flags: <defaults>
</compile_context>

<pallas_src>
import jax
import jax.numpy as jnp
from jax.experimental import pallas as pl
from jax.experimental.pallas import tpu as pltpu


def _round_up(x, n):
    return ((x + n - 1) // n) * n


def _bilinear_kernel(state_ref, x_ref, e_rep_ref, e_tile_ref, w_ref, o_ref):
    # state_ref: (Bt, R1)        x_ref   : (Bt, R2)
    # e_rep_ref: (R1, R1*R2)     e_tile_ref: (R2, R1*R2)
    # w_ref    : (R1*R2, m)      o_ref   : (Bt, m)
    s = state_ref[...]
    x = x_ref[...]

    # Lane-dense outer product, no minor-dims reshape relayout:
    #   zs[b, i*R2 + j] = s[b, i]      (selection matmul, MXU)
    #   zx[b, i*R2 + j] = x[b, j]      (selection matmul, MXU)
    zs = jnp.dot(s, e_rep_ref[...], preferred_element_type=jnp.float32)
    zx = jnp.dot(x, e_tile_ref[...], preferred_element_type=jnp.float32)
    z = zs * zx                                            # (Bt, R1*R2), VPU

    # Single MXU matmul, K = R1*R2, f32 accumulation.
    o_ref[...] = jnp.dot(
        z, w_ref[...], preferred_element_type=jnp.float32
    ).astype(o_ref.dtype)


def prepare_weight(weight):
    """Precompute the resident kernel parameters from the nn.Bilinear weight.

    weight: (m, R1, R2).  Returns (w_flat, e_rep, e_tile) with
      w_flat[i*R2 + j, o] = weight[o, i, j]                 (R1*R2, m)
      e_rep  = kron(I_R1, ones(1, R2))                      (R1, R1*R2)
      e_tile = kron(ones(1, R1), I_R2)                      (R2, R1*R2)
    This is a constant relayout of the parameters; memoize it once per
    parameter update and pass it via `prepared=` instead of paying it on every
    forward call.
    """
    m, r1, r2 = weight.shape
    w_flat = jnp.transpose(weight, (1, 2, 0)).reshape(r1 * r2, m)
    dt = w_flat.dtype
    e_rep = jnp.kron(jnp.eye(r1, dtype=dt), jnp.ones((1, r2), dtype=dt))
    e_tile = jnp.kron(jnp.ones((1, r1), dtype=dt), jnp.eye(r2, dtype=dt))
    return w_flat, e_rep, e_tile


def kernel_tensor_train_with_state(inp, state, weight=None, *,
                                   prepared=None, block_b=16384):
    """Pallas implementation of KernelTensorTrainWithState.forward(input, state).

    inp    : (B, second_rank)
    state  : (B, first_rank)
    weight : (m, first_rank, second_rank)  -- nn.Bilinear weight (or pass
             `prepared=prepare_weight(weight)` to skip the per-call relayout)
    returns: (B, m)
    """
    B, r2 = inp.shape
    bs, r1 = state.shape
    assert B == bs

    if prepared is None:
        assert weight is not None
        prepared = prepare_weight(weight)
    w_flat, e_rep, e_tile = prepared
    kdim, m = w_flat.shape
    assert kdim == r1 * r2

    out_dtype = jnp.result_type(state.dtype, inp.dtype, w_flat.dtype)

    # Batch tile: sublane (8) multiple; no wrapper-side padding — Pallas masks
    # the ragged last block's writeback, so garbage rows never reach HBM.
    bt = _round_up(min(block_b, _round_up(B, 8)), 8)
    grid = (pl.cdiv(B, bt),)

    out = pl.pallas_call(
        _bilinear_kernel,
        out_shape=jax.ShapeDtypeStruct((B, m), out_dtype),
        grid_spec=pltpu.PrefetchScalarGridSpec(
            num_scalar_prefetch=0,
            grid=grid,
            in_specs=[
                pl.BlockSpec((bt, r1), lambda i: (i, 0)),        # state tile
                pl.BlockSpec((bt, r2), lambda i: (i, 0)),        # input tile
                pl.BlockSpec((r1, r1 * r2), lambda i: (0, 0)),   # E_rep (resident)
                pl.BlockSpec((r2, r1 * r2), lambda i: (0, 0)),   # E_tile (resident)
                pl.BlockSpec((r1 * r2, m), lambda i: (0, 0)),    # W_flat (resident)
            ],
            out_specs=pl.BlockSpec((bt, m), lambda i: (i, 0)),
        ),
        compiler_params=pltpu.CompilerParams(
            dimension_semantics=("parallel",),
        ),
    )(state, inp, e_rep, e_tile, w_flat)

    return out


if __name__ == "__main__":
    # Small, deterministic shapes consistent with the module's __init__.
    first_rank, m, second_rank = 8, 16, 8

    key = jax.random.PRNGKey(0)
    k_w, k_in1, k_st1, k_in2, k_st2, k_in3, k_st3 = jax.random.split(key, 7)

    # nn.Bilinear default init: U(-1/sqrt(in1_features), 1/sqrt(in1_features))
    bound = 1.0 / (first_rank ** 0.5)
    weight = jax.random.uniform(
        k_w, (m, first_rank, second_rank), jnp.float32, -bound, bound)

    # Hoisted parameter relayout (memoized by the caller).
    prepared = jax.tree.map(jax.block_until_ready, prepare_weight(weight))

    # Case 1: batch that tiles the grid exactly (4 grid steps of 64 rows).
    B1 = 256
    x1 = jax.random.normal(k_in1, (B1, second_rank), jnp.float32)
    s1 = jax.random.normal(k_st1, (B1, first_rank), jnp.float32)
    out1 = jax.block_until_ready(
        kernel_tensor_train_with_state(x1, s1, prepared=prepared, block_b=64))
    ref1 = jnp.einsum("bi,oij,bj->bo", s1, weight, x1)
    assert out1.shape == (B1, m)
    assert jnp.allclose(out1, ref1, atol=1e-5, rtol=1e-5)

    # Case 2: ragged batch, single grid step (boundary-masked writeback).
    B2 = 37
    x2 = jax.random.normal(k_in2, (B2, second_rank), jnp.float32)
    s2 = jax.random.normal(k_st2, (B2, first_rank), jnp.float32)
    out2 = jax.block_until_ready(
        kernel_tensor_train_with_state(x2, s2, weight))
    ref2 = jnp.einsum("bi,oij,bj->bo", s2, weight, x2)
    assert out2.shape == (B2, m)
    assert jnp.allclose(out2, ref2, atol=1e-5, rtol=1e-5)

    # Case 3: ragged batch with multiple grid steps (last block partial).
    B3 = 100
    x3 = jax.random.normal(k_in3, (B3, second_rank), jnp.float32)
    s3 = jax.random.normal(k_st3, (B3, first_rank), jnp.float32)
    out3 = jax.block_until_ready(
        kernel_tensor_train_with_state(x3, s3, prepared=prepared, block_b=32))
    ref3 = jnp.einsum("bi,oij,bj->bo", s3, weight, x3)
    assert out3.shape == (B3, m)
    assert jnp.allclose(out3, ref3, atol=1e-5, rtol=1e-5)

    print("KERNEL_OK")
</pallas_src>

<mosaic_0001>
module attributes {stable_mosaic.version = 11 : i64} {
  func.func @_bilinear_kernel(%arg0: i32, %arg1: memref<64x8xf32, #tpu.memory_space<vmem>>, %arg2: memref<64x8xf32, #tpu.memory_space<vmem>>, %arg3: memref<8x64xf32, #tpu.memory_space<vmem>>, %arg4: memref<8x64xf32, #tpu.memory_space<vmem>>, %arg5: memref<64x16xf32, #tpu.memory_space<vmem>>, %arg6: memref<64x16xf32, #tpu.memory_space<vmem>>) attributes {dimension_semantics = [#tpu.dimension_semantics<parallel>], iteration_bounds = array<i64: 4>, scalar_prefetch = 0 : i64, scratch_operands = 0 : i64, tpu.core_type = #tpu.core_type<tc>, window_params = [{transform_indices = @transform_0, window_bounds = array<i64: 64, 8>}, {transform_indices = @transform_1, window_bounds = array<i64: 64, 8>}, {pipeline_mode = #tpu.pipeline_mode<synchronous>, transform_indices = @transform_2, window_bounds = array<i64: 8, 64>}, {pipeline_mode = #tpu.pipeline_mode<synchronous>, transform_indices = @transform_3, window_bounds = array<i64: 8, 64>}, {pipeline_mode = #tpu.pipeline_mode<synchronous>, transform_indices = @transform_4, window_bounds = array<i64: 64, 16>}, {transform_indices = @transform_5, window_bounds = array<i64: 64, 16>}]} {
    %c0 = arith.constant 0 : index
    %c0_0 = arith.constant 0 : index
    %0 = vector.load %arg1[%c0, %c0_0] : memref<64x8xf32, #tpu.memory_space<vmem>>, vector<64x8xf32>
    %c0_1 = arith.constant 0 : index
    %c0_2 = arith.constant 0 : index
    %1 = vector.load %arg2[%c0_1, %c0_2] : memref<64x8xf32, #tpu.memory_space<vmem>>, vector<64x8xf32>
    %c0_3 = arith.constant 0 : index
    %c0_4 = arith.constant 0 : index
    %2 = vector.load %arg3[%c0_3, %c0_4] : memref<8x64xf32, #tpu.memory_space<vmem>>, vector<8x64xf32>
    %cst = arith.constant dense<0.000000e+00> : vector<64x64xf32>
    %3 = tpu.matmul %0, %2, %cst {dimension_numbers = #tpu.dot_dimension_numbers<[1], [0], [0], [1], [0, 0, 1, 1], [], []>} : vector<64x8xf32>, vector<8x64xf32>, vector<64x64xf32> -> vector<64x64xf32>
    %c0_5 = arith.constant 0 : index
    %c0_6 = arith.constant 0 : index
    %4 = vector.load %arg4[%c0_5, %c0_6] : memref<8x64xf32, #tpu.memory_space<vmem>>, vector<8x64xf32>
    %cst_7 = arith.constant dense<0.000000e+00> : vector<64x64xf32>
    %5 = tpu.matmul %1, %4, %cst_7 {dimension_numbers = #tpu.dot_dimension_numbers<[1], [0], [0], [1], [0, 0, 1, 1], [], []>} : vector<64x8xf32>, vector<8x64xf32>, vector<64x64xf32> -> vector<64x64xf32>
    %6 = arith.mulf %3, %5 : vector<64x64xf32>
    %c0_8 = arith.constant 0 : index
    %c0_9 = arith.constant 0 : index
    %7 = vector.load %arg5[%c0_8, %c0_9] : memref<64x16xf32, #tpu.memory_space<vmem>>, vector<64x16xf32>
    %cst_10 = arith.constant dense<0.000000e+00> : vector<64x16xf32>
    %8 = tpu.matmul %6, %7, %cst_10 {dimension_numbers = #tpu.dot_dimension_numbers<[1], [0], [0], [1], [0, 0, 1, 1], [], []>} : vector<64x64xf32>, vector<64x16xf32>, vector<64x16xf32> -> vector<64x16xf32>
    %c0_11 = arith.constant 0 : index
    %c0_12 = arith.constant 0 : index
    %9 = vector.load %arg6[%c0_11, %c0_12] : memref<64x16xf32, #tpu.memory_space<vmem>>, vector<64x16xf32>
    tpu.vector_store %arg6[%c0_11, %c0_12], %8 {strides = array<i32>} : memref<64x16xf32, #tpu.memory_space<vmem>>, vector<64x16xf32>,
    return
  }
  func.func @transform_0(%arg0: i32) -> (i32, i32) {
    %c0_i32 = arith.constant 0 : i32
    %c0_i32_0 = arith.constant 0 : i32
    return %arg0, %c0_i32 : i32, i32
  }
  func.func @transform_1(%arg0: i32) -> (i32, i32) {
    %c0_i32 = arith.constant 0 : i32
    %c0_i32_0 = arith.constant 0 : i32
    return %arg0, %c0_i32 : i32, i32
  }
  func.func @transform_2(%arg0: i32) -> (i32, i32) {
    %c0_i32 = arith.constant 0 : i32
    %c0_i32_0 = arith.constant 0 : i32
    %c0_i32_1 = arith.constant 0 : i32
    return %c0_i32, %c0_i32_0 : i32, i32
  }
  func.func @transform_3(%arg0: i32) -> (i32, i32) {
    %c0_i32 = arith.constant 0 : i32
    %c0_i32_0 = arith.constant 0 : i32
    %c0_i32_1 = arith.constant 0 : i32
    return %c0_i32, %c0_i32_0 : i32, i32
  }
  func.func @transform_4(%arg0: i32) -> (i32, i32) {
    %c0_i32 = arith.constant 0 : i32
    %c0_i32_0 = arith.constant 0 : i32
    %c0_i32_1 = arith.constant 0 : i32
    return %c0_i32, %c0_i32_0 : i32, i32
  }
  func.func @transform_5(%arg0: i32) -> (i32, i32) {
    %c0_i32 = arith.constant 0 : i32
    %c0_i32_0 = arith.constant 0 : i32
    return %arg0, %c0_i32 : i32, i32
  }
}

</mosaic_0001>

<llo_original>
// kernel: tpu_custom_call.1
$region0: #{tpu_custom_call.1}
  #allocation0 [shape = 'u32[]', space=smem, size = 0x4, offset = 0x4, fixed_abs, tag = 'smem constant byte address 0x4 - core index']
  #allocation1 [shape = 'u32[144,128]{1,0:T(1,128)}', space=vmem, size = 0x12000, scoped, tag = 'internal scratch']
  %s0 = inlined_call_operand.vmem [shape: f32[256,8], index: 0, kind: input, shape index: {}]
  %s1 = inlined_call_operand.vmem [shape: f32[256,8], index: 1, kind: input, shape index: {}]
  %s2 = inlined_call_operand.vmem [shape: f32[8,64], index: 2, kind: input, shape index: {}]
  %s3 = inlined_call_operand.vmem [shape: f32[8,64], index: 3, kind: input, shape index: {}]
  %s4 = inlined_call_operand.vmem [shape: f32[64,16], index: 4, kind: input, shape index: {}]
  %s5 = inlined_call_operand.vmem [shape: f32[256,16], index: 5, kind: output, shape index: {}]
  %s6 = sld [smem:[#allocation0]]
  $region53: #{tpu_custom_call.1} parent=0
    _
  %s8 = ssub.s32 1, %s6
  %s9 = scalar_select 0, %s8, %s6
  loop: start=0, step=1, limit=6
  $region2: #{tpu_custom_call.1} parent=0 // loop_pre_header
    _
  $region3: #{tpu_custom_call.1} parent=0 // loop_header
    %s11 = sphi 0, %s15
    %p12 = scmp.ge.s32.totalorder %s11, 6
    %s21 = sphi 0, %s23
    %s24 = sphi 0, %s21
    %s25 = sphi 0, %s24
    %s41 = sphi 0, %s25
    %s47 = sphi 0, %s49
    %s50 = sphi 0, %s47
    %s51 = sphi 0, %s50
    %s67 = sphi 0, %s51
    %s71 = sphi 0, %s71
    %s73 = sphi 0, %s71
    %s74 = sphi 0, %s73
    %s88 = sphi 0, %s74
    %s92 = sphi 0, %s92
    %s94 = sphi 0, %s92
    %s95 = sphi 0, %s94
    %s109 = sphi 0, %s95
    %s113 = sphi 0, %s113
    %s115 = sphi 0, %s113
    %s116 = sphi 0, %s115
    %s130 = sphi 0, %s116
    %s136 = sphi 0, %s138
    %s139 = sphi 0, %s136
    %s140 = sphi 0, %s139
    %s156 = sphi 0, %s140
  $region4: #{tpu_custom_call.1} parent=0 // loop_header_branch
    %14 = sbr.rel (%p12) target = $region8
  $region5: #{tpu_custom_call.1} parent=0 // loop_body
    %s16 = ssub.s32 %s11, 1
    %s17 = ssub.s32 %s11, 2
    %s18 = sadd.s32 %s11, 1
    %s19 = ssub.s32 %s11, %s18
    %p20 = scmp.eq.s32.totalorder %s19, 0
    %s22 = sadd.s32 %s21, 1
    %s23 = scalar_select %p20, %s21, %s22
    %p26 = pneg %p20
    %p27 = scmp.eq.s32.totalorder %s11, 3
    %p28 = por %p26, %p27
    %p29 = scmp.ne.s32.totalorder %s21, %s24
    %p30 = scmp.eq.s32.totalorder %s11, 0
    %p31 = por %p29, %p30
    %p32 = scmp.ne.s32.totalorder %s21, %s24
    %p33 = scmp.eq.s32.totalorder %s16, 3
    %p34 = por %p32, %p33
    %p35 = scmp.ne.s32.totalorder %s24, %s25
    %p36 = scmp.eq.s32.totalorder %s16, 0
    %p37 = por %p35, %p36
    %p38 = scmp.ne.s32.totalorder %s24, %s25
    %p39 = scmp.eq.s32.totalorder %s17, 3
    %p40 = por %p38, %p39
    %p42 = scmp.ne.s32.totalorder %s25, %s41
    %p43 = scmp.eq.s32.totalorder %s17, 0
    %p44 = por %p42, %p43
    %s45 = ssub.s32 %s11, %s18
    %p46 = scmp.eq.s32.totalorder %s45, 0
    %s48 = sadd.s32 %s47, 1
    %s49 = scalar_select %p46, %s47, %s48
    %p52 = pneg %p46
    %p53 = scmp.eq.s32.totalorder %s11, 3
    %p54 = por %p52, %p53
    %p55 = scmp.ne.s32.totalorder %s47, %s50
    %p56 = scmp.eq.s32.totalorder %s11, 0
    %p57 = por %p55, %p56
    %p58 = scmp.ne.s32.totalorder %s47, %s50
    %p59 = scmp.eq.s32.totalorder %s16, 3
    %p60 = por %p58, %p59
    %p61 = scmp.ne.s32.totalorder %s50, %s51
    %p62 = scmp.eq.s32.totalorder %s16, 0
    %p63 = por %p61, %p62
    %p64 = scmp.ne.s32.totalorder %s50, %s51
    %p65 = scmp.eq.s32.totalorder %s17, 3
    %p66 = por %p64, %p65
    %p68 = scmp.ne.s32.totalorder %s51, %s67
    %p69 = scmp.eq.s32.totalorder %s17, 0
    %p70 = por %p68, %p69
    %s72 = sadd.s32 %s71, 1
    %p75 = scmp.eq.s32.totalorder %s11, 3
    %p76 = scmp.ne.s32.totalorder %s71, %s73
    %p77 = scmp.eq.s32.totalorder %s11, 0
    %p78 = por %p76, %p77
    %p79 = scmp.ne.s32.totalorder %s71, %s73
    %p80 = scmp.eq.s32.totalorder %s16, 3
    %p81 = por %p79, %p80
    %p82 = scmp.ne.s32.totalorder %s73, %s74
    %p83 = scmp.eq.s32.totalorder %s16, 0
    %p84 = por %p82, %p83
    %p85 = scmp.ne.s32.totalorder %s73, %s74
    %p86 = scmp.eq.s32.totalorder %s17, 3
    %p87 = por %p85, %p86
    %p89 = scmp.ne.s32.totalorder %s74, %s88
    %p90 = scmp.eq.s32.totalorder %s17, 0
    %p91 = por %p89, %p90
    %s93 = sadd.s32 %s92, 1
    %p96 = scmp.eq.s32.totalorder %s11, 3
    %p97 = scmp.ne.s32.totalorder %s92, %s94
    %p98 = scmp.eq.s32.totalorder %s11, 0
    %p99 = por %p97, %p98
    %p100 = scmp.ne.s32.totalorder %s92, %s94
    %p101 = scmp.eq.s32.totalorder %s16, 3
    %p102 = por %p100, %p101
    %p103 = scmp.ne.s32.totalorder %s94, %s95
    %p104 = scmp.eq.s32.totalorder %s16, 0
    %p105 = por %p103, %p104
    %p106 = scmp.ne.s32.totalorder %s94, %s95
    %p107 = scmp.eq.s32.totalorder %s17, 3
    %p108 = por %p106, %p107
    %p110 = scmp.ne.s32.totalorder %s95, %s109
    %p111 = scmp.eq.s32.totalorder %s17, 0
    %p112 = por %p110, %p111
    %s114 = sadd.s32 %s113, 1
    %p117 = scmp.eq.s32.totalorder %s11, 3
    %p118 = scmp.ne.s32.totalorder %s113, %s115
    %p119 = scmp.eq.s32.totalorder %s11, 0
    %p120 = por %p118, %p119
    %p121 = scmp.ne.s32.totalorder %s113, %s115
    %p122 = scmp.eq.s32.totalorder %s16, 3
    %p123 = por %p121, %p122
    %p124 = scmp.ne.s32.totalorder %s115, %s116
    %p125 = scmp.eq.s32.totalorder %s16, 0
    %p126 = por %p124, %p125
    %p127 = scmp.ne.s32.totalorder %s115, %s116
    %p128 = scmp.eq.s32.totalorder %s17, 3
    %p129 = por %p127, %p128
    %p131 = scmp.ne.s32.totalorder %s116, %s130
    %p132 = scmp.eq.s32.totalorder %s17, 0
    %p133 = por %p131, %p132
    %s134 = ssub.s32 %s11, %s18
    %p135 = scmp.eq.s32.totalorder %s134, 0
    %s137 = sadd.s32 %s136, 1
    %s138 = scalar_select %p135, %s136, %s137
    %p141 = pneg %p135
    %p142 = scmp.eq.s32.totalorder %s11, 3
    %p143 = por %p141, %p142
    %p144 = scmp.ne.s32.totalorder %s136, %s139
    %p145 = scmp.eq.s32.totalorder %s11, 0
    %p146 = por %p144, %p145
    %p147 = scmp.ne.s32.totalorder %s136, %s139
    %p148 = scmp.eq.s32.totalorder %s16, 3
    %p149 = por %p147, %p148
    %p150 = scmp.ne.s32.totalorder %s139, %s140
    %p151 = scmp.eq.s32.totalorder %s16, 0
    %p152 = por %p150, %p151
    %p153 = scmp.ne.s32.totalorder %s139, %s140
    %p154 = scmp.eq.s32.totalorder %s17, 3
    %p155 = por %p153, %p154
    %p157 = scmp.ne.s32.totalorder %s140, %s156
    %p158 = scmp.eq.s32.totalorder %s17, 0
    %p159 = por %p157, %p158
    %p160 = scmp.le.s32.totalorder 1, %s11
    %p161 = scmp.lt.s32.totalorder %s11, 5
    %p162 = pnand %p160, %p161
    %p163 = pneg %p162
    // Predicated region
    $region9: #{tpu_custom_call.1} parent=5 // pred_check
      _
    $region10: #{tpu_custom_call.1} parent=5 // pred_check_branch
      %165 = sbr.rel (%p162) target = $region12
    $region11: #{tpu_custom_call.1} parent=5 // pred_region
      %s166 = ssub.s32 %s11, 1
      // Predicated region
      $region13: #{tpu_custom_call.1} parent=11 // pred_check
        %p167 = pneg %p84
      $region14: #{tpu_custom_call.1} parent=11 // pred_check_branch
        %169 = sbr.rel (%p167) target = $region16
      $region15: #{tpu_custom_call.1} parent=11 // pred_region
        _
      $region16: #{tpu_custom_call.1} parent=11 // pred_fallthru
        _
      // Predicated region
      $region17: #{tpu_custom_call.1} parent=11 // pred_check
        %p170 = pneg %p105
      $region18: #{tpu_custom_call.1} parent=11 // pred_check_branch
        %172 = sbr.rel (%p170) target = $region20
      $region19: #{tpu_custom_call.1} parent=11 // pred_region
        _
      $region20: #{tpu_custom_call.1} parent=11 // pred_fallthru
        _
      // Predicated region
      $region21: #{tpu_custom_call.1} parent=11 // pred_check
        %p173 = pneg %p126
      $region22: #{tpu_custom_call.1} parent=11 // pred_check_branch
        %175 = sbr.rel (%p173) target = $region24
      $region23: #{tpu_custom_call.1} parent=11 // pred_region
        _
      $region24: #{tpu_custom_call.1} parent=11 // pred_fallthru
        _
    $region12: #{tpu_custom_call.1} parent=5 // pred_fallthru
      _
    %p176 = scmp.lt.s32.totalorder %s11, 4
    // Predicated region
    $region25: #{tpu_custom_call.1} parent=5 // pred_check
      %p177 = pneg %p176
    $region26: #{tpu_custom_call.1} parent=5 // pred_check_branch
      %179 = sbr.rel (%p177) target = $region28
    $region27: #{tpu_custom_call.1} parent=5 // pred_region
      // Predicated region
      $region29: #{tpu_custom_call.1} parent=27 // pred_check
        %p180 = pneg %p31
      $region30: #{tpu_custom_call.1} parent=27 // pred_check_branch
        %182 = sbr.rel (%p180) target = $region32
      $region31: #{tpu_custom_call.1} parent=27 // pred_region
        %s183 = smul.u32 8, %s11
        %p184 = scmp.lt.s32.totalorder %s183, 31
        %s185 = scalar_select %p184, %s183, 31
        %s186 = smul.addr %s185, 8
        %s187 = scalar_lea.vmem %s0, %s186
        %s188 = smul.u32 8, %s11
      $region32: #{tpu_custom_call.1} parent=27 // pred_fallthru
        _
      // Predicated region
      $region33: #{tpu_custom_call.1} parent=27 // pred_check
        %p189 = pneg %p57
      $region34: #{tpu_custom_call.1} parent=27 // pred_check_branch
        %191 = sbr.rel (%p189) target = $region36
      $region35: #{tpu_custom_call.1} parent=27 // pred_region
        %s192 = smul.u32 8, %s11
        %p193 = scmp.lt.s32.totalorder %s192, 31
        %s194 = scalar_select %p193, %s192, 31
        %s195 = smul.addr %s194, 8
        %s196 = scalar_lea.vmem %s1, %s195
        %s197 = smul.u32 8, %s11
      $region36: #{tpu_custom_call.1} parent=27 // pred_fallthru
        _
    $region28: #{tpu_custom_call.1} parent=5 // pred_fallthru
      _
    %p198 = scmp.le.s32.totalorder 1, %s11
    %p199 = scmp.lt.s32.totalorder %s11, 5
    %p200 = pnand %p198, %p199
    %p201 = pneg %p200
    // Predicated region
    $region37: #{tpu_custom_call.1} parent=5 // pred_check
      _
    $region38: #{tpu_custom_call.1} parent=5 // pred_check_branch
      %203 = sbr.rel (%p200) target = $region40
    $region39: #{tpu_custom_call.1} parent=5 // pred_region
      %s204 = ssub.s32 %s11, 1
      %s205 = smul.u32 8, %s16
      %p206 = scmp.lt.s32.totalorder %s205, 31
      %s207 = scalar_select %p206, %s205, 31
      %s208 = smul.addr %s207, 8
      %s209 = scalar_lea.vmem %s0, %s208
      %p210 = pneg %p37
      %p211 = pneg %p34
      %s212 = smul.u32 8, %s16
      %p213 = scmp.lt.s32.totalorder %s212, 31
      %s214 = scalar_select %p213, %s212, 31
      %s215 = smul.addr %s214, 8
      %s216 = scalar_lea.vmem %s1, %s215
      %p217 = pneg %p63
      %p218 = pneg %p60
      %p219 = pneg %p84
      %p220 = pneg %p81
      %p221 = pneg %p105
      %p222 = pneg %p102
      %p223 = pneg %p126
      %p224 = pneg %p123
      %p225 = pneg %p152
      %p226 = pneg %p149
      %s227 = smul.u32 8, %s16
      %p228 = scmp.lt.s32.totalorder %s227, 31
      %s229 = scalar_select %p228, %s227, 31
      %s230 = smul.addr %s229, 8
      %s231 = scalar_lea.vmem %s5, %s230
      %s232 = smul.u32 8, %s16
      %p233 = scmp.lt.s32.totalorder %s232, 31
      %s234 = scalar_select %p233, %s232, 31
      %s235 = smul.addr %s234, 8
      %s236 = scalar_lea.vmem %s0, %s235
      %s237 = smul.u32 8, %s16
      %s238 = smul.u32 8, %s16
      %p239 = scmp.lt.s32.totalorder %s238, 31
      %s240 = scalar_select %p239, %s238, 31
      %s241 = smul.addr %s240, 8
      %s242 = scalar_lea.vmem %s1, %s241
      %s243 = smul.u32 8, %s16
      %s244 = smul.u32 8, %s16
      %p245 = scmp.lt.s32.totalorder %s244, 31
      %s246 = scalar_select %p245, %s244, 31
      %s247 = smul.addr %s246, 8
      %s248 = scalar_lea.vmem %s5, %s247
      %s249 = smul.u32 8, %s16
      %v250 = vld [vmem:[%s236] sm:$0xff]
      %v251 = vld [vmem:[%s236 + $0x8] sm:$0xff]
      %v252 = vld [vmem:[%s236 + $0x10] sm:$0xff]
      %v253 = vld [vmem:[%s236 + $0x18] sm:$0xff]
      %v254 = vld [vmem:[%s236 + $0x20] sm:$0xff]
      %v255 = vld [vmem:[%s236 + $0x28] sm:$0xff]
      %v256 = vld [vmem:[%s236 + $0x30] sm:$0xff]
      %v257 = vld [vmem:[%s236 + $0x38] sm:$0xff]
      %v258 = vld [vmem:[%s242] sm:$0xff]
      %v259 = vld [vmem:[%s242 + $0x8] sm:$0xff]
      %v260 = vld [vmem:[%s242 + $0x10] sm:$0xff]
      %v261 = vld [vmem:[%s242 + $0x18] sm:$0xff]
      %v262 = vld [vmem:[%s242 + $0x20] sm:$0xff]
      %v263 = vld [vmem:[%s242 + $0x28] sm:$0xff]
      %v264 = vld [vmem:[%s242 + $0x30] sm:$0xff]
      %v265 = vld [vmem:[%s242 + $0x38] sm:$0xff]
      %v266 = vld [vmem:[%s2] sm:$0xff]
      %vm267 = vcmask 64512
      %v269 = vsel %vm267, %v250, 0
      %v272 = vsel %vm267, %v251, 0
      %v275 = vsel %vm267, %v252, 0
      %v278 = vsel %vm267, %v253, 0
      %v281 = vsel %vm267, %v254, 0
      %v284 = vsel %vm267, %v255, 0
      %v287 = vsel %vm267, %v256, 0
      %v290 = vsel %vm267, %v257, 0
      %292 = vmatprep.subr.mxu0 0.0
      %293 = vmatpush1.msra.mxu0 %v266
      %294 = vmatprep.subr.mxu0 0.0
      %295 = vmatpush1.msra.mxu0 0.0
      %296 = vmatprep.subr.mxu0 0.0
      %297 = vmatpush1.msra.mxu0 0.0
      %298 = vmatprep.subr.mxu0 0.0
      %299 = vmatpush1.msra.mxu0 0.0
      %300 = vmatprep.subr.mxu0 0.0
      %301 = vmatpush1.msra.mxu0 0.0
      %302 = vmatprep.subr.mxu0 0.0
      %303 = vmatpush1.msra.mxu0 0.0
      %304 = vmatprep.subr.mxu0 0.0
      %305 = vmatpush1.msra.mxu0 0.0
      %306 = vmatprep.subr.mxu0 0.0
      %307 = vmatpush1.msra.mxu0 0.0
      %308 = vmatprep.subr.mxu0 0.0
      %309 = vmatpush1.msra.mxu0 0.0
      %310 = vmatprep.subr.mxu0 0.0
      %311 = vmatpush1.msra.mxu0 0.0
      %312 = vmatprep.subr.mxu0 0.0
      %313 = vmatpush1.msra.mxu0 0.0
      %314 = vmatprep.subr.mxu0 0.0
      %315 = vmatpush1.msra.mxu0 0.0
      %316 = vmatprep.subr.mxu0 0.0
      %317 = vmatpush1.msra.mxu0 0.0
      %318 = vmatprep.subr.mxu0 0.0
      %319 = vmatpush1.msra.mxu0 0.0
      %320 = vmatprep.subr.mxu0 0.0
      %321 = vmatpush1.msra.mxu0 0.0
      %322 = vmatprep.subr.mxu0 0.0
      %323 = vmatpush1.msra.mxu0 0.0
      %324 = vmatprep.subr.mxu0 0.0
      %325 = vmatpush1.msra.mxu0 0.0
      %326 = vmatprep.subr.mxu0 0.0
      %327 = vmatpush1.msra.mxu0 0.0
      %328 = vmatprep.subr.mxu0 0.0
      %329 = vmatpush1.msra.mxu0 0.0
      %330 = vmatprep.subr.mxu0 0.0
      %331 = vmatpush1.msra.mxu0 0.0
      %332 = vmatprep.subr.mxu0 0.0
      %333 = vmatpush1.msra.mxu0 0.0
      %334 = vmatprep.subr.mxu0 0.0
      %335 = vmatpush1.msra.mxu0 0.0
      %336 = vmatprep.subr.mxu0 0.0
      %337 = vmatpush1.msra.mxu0 0.0
      %338 = vmatprep.subr.mxu0 0.0
      %339 = vmatpush1.msra.mxu0 0.0
      %340 = vmatprep.subr.mxu0 0.0
      %341 = vmatpush1.msra.mxu0 0.0
      %342 = vmatprep.subr.mxu0 0.0
      %343 = vmatpush1.msra.mxu0 0.0
      %344 = vmatprep.subr.mxu0 0.0
      %345 = vmatpush1.msra.mxu0 0.0
      %346 = vmatprep.subr.mxu0 0.0
      %347 = vmatpush1.msra.mxu0 0.0
      %348 = vmatprep.subr.mxu0 0.0
      %349 = vmatpush1.msra.mxu0 0.0
      %350 = vmatprep.subr.mxu0 0.0
      %351 = vmatpush1.msra.mxu0 0.0
      %352 = vmatprep.subr.mxu0 0.0
      %353 = vmatpush1.msra.mxu0 0.0
      %354 = vmatprep.subr.mxu0 0.0
      %355 = vmatpush1.msra.mxu0 0.0
      %356 = vmatprep.mubr.f32.mxu0 0.0
      %357 = vmatmul.mubr.f32.gmra.mrb[0].mxu0 %v269
      %v358 = vpop.f32.mrb[0].mxu0
      %v359 = vadd.f32 0.0, %v358
      %v360 = vpop.f32.mrb[0].mxu0
      %361 = vmatprep.mubr.f32.mxu0 0.0
      %362 = vmatmul.mubr.f32.gmra.mrb[0].mxu0 %v272
      %v363 = vpop.f32.mrb[0].mxu0
      %v364 = vadd.f32 0.0, %v363
      %v365 = vpop.f32.mrb[0].mxu0
      %366 = vmatprep.mubr.f32.mxu0 0.0
      %367 = vmatmul.mubr.f32.gmra.mrb[0].mxu0 %v275
      %v368 = vpop.f32.mrb[0].mxu0
      %v369 = vadd.f32 0.0, %v368
      %v370 = vpop.f32.mrb[0].mxu0
      %371 = vmatprep.mubr.f32.mxu0 0.0
      %372 = vmatmul.mubr.f32.gmra.mrb[0].mxu0 %v278
      %v373 = vpop.f32.mrb[0].mxu0
      %v374 = vadd.f32 0.0, %v373
      %v375 = vpop.f32.mrb[0].mxu0
      %376 = vmatprep.mubr.f32.mxu0 0.0
      %377 = vmatmul.mubr.f32.gmra.mrb[0].mxu0 %v281
      %v378 = vpop.f32.mrb[0].mxu0
      %v379 = vadd.f32 0.0, %v378
      %v380 = vpop.f32.mrb[0].mxu0
      %381 = vmatprep.mubr.f32.mxu0 0.0
      %382 = vmatmul.mubr.f32.gmra.mrb[0].mxu0 %v284
      %v383 = vpop.f32.mrb[0].mxu0
      %v384 = vadd.f32 0.0, %v383
      %v385 = vpop.f32.mrb[0].mxu0
      %386 = vmatprep.mubr.f32.mxu0 0.0
      %387 = vmatmul.mubr.f32.gmra.mrb[0].mxu0 %v287
      %v388 = vpop.f32.mrb[0].mxu0
      %v389 = vadd.f32 0.0, %v388
      %v390 = vpop.f32.mrb[0].mxu0
      %391 = vmatprep.mubr.f32.mxu0 0.0
      %392 = vmatmul.mubr.f32.gmra.mrb[0].mxu0 %v290
      %v393 = vpop.f32.mrb[0].mxu0
      %v394 = vadd.f32 0.0, %v393
      %v395 = vpop.f32.mrb[0].mxu0
      %396 = vdwg.mxu0
      %v397 = vld [vmem:[%s3] sm:$0xff]
      %v399 = vsel %vm267, %v258, 0
      %v402 = vsel %vm267, %v259, 0
      %v405 = vsel %vm267, %v260, 0
      %v408 = vsel %vm267, %v261, 0
      %v411 = vsel %vm267, %v262, 0
      %v414 = vsel %vm267, %v263, 0
      %v417 = vsel %vm267, %v264, 0
      %v420 = vsel %vm267, %v265, 0
      %422 = vmatprep.subr.mxu0 0.0
      %423 = vmatpush1.msra.mxu0 %v397
      %424 = vmatprep.subr.mxu0 0.0
      %425 = vmatpush1.msra.mxu0 0.0
      %426 = vmatprep.subr.mxu0 0.0
      %427 = vmatpush1.msra.mxu0 0.0
      %428 = vmatprep.subr.mxu0 0.0
      %429 = vmatpush1.msra.mxu0 0.0
      %430 = vmatprep.subr.mxu0 0.0
      %431 = vmatpush1.msra.mxu0 0.0
      %432 = vmatprep.subr.mxu0 0.0
      %433 = vmatpush1.msra.mxu0 0.0
      %434 = vmatprep.subr.mxu0 0.0
      %435 = vmatpush1.msra.mxu0 0.0
      %436 = vmatprep.subr.mxu0 0.0
      %437 = vmatpush1.msra.mxu0 0.0
      %438 = vmatprep.subr.mxu0 0.0
      %439 = vmatpush1.msra.mxu0 0.0
      %440 = vmatprep.subr.mxu0 0.0
      %441 = vmatpush1.msra.mxu0 0.0
      %442 = vmatprep.subr.mxu0 0.0
      %443 = vmatpush1.msra.mxu0 0.0
      %444 = vmatprep.subr.mxu0 0.0
      %445 = vmatpush1.msra.mxu0 0.0
      %446 = vmatprep.subr.mxu0 0.0
      %447 = vmatpush1.msra.mxu0 0.0
      %448 = vmatprep.subr.mxu0 0.0
      %449 = vmatpush1.msra.mxu0 0.0
      %450 = vmatprep.subr.mxu0 0.0
      %451 = vmatpush1.msra.mxu0 0.0
      %452 = vmatprep.subr.mxu0 0.0
      %453 = vmatpush1.msra.mxu0 0.0
      %454 = vmatprep.subr.mxu0 0.0
      %455 = vmatpush1.msra.mxu0 0.0
      %456 = vmatprep.subr.mxu0 0.0
      %457 = vmatpush1.msra.mxu0 0.0
      %458 = vmatprep.subr.mxu0 0.0
      %459 = vmatpush1.msra.mxu0 0.0
      %460 = vmatprep.subr.mxu0 0.0
      %461 = vmatpush1.msra.mxu0 0.0
      %462 = vmatprep.subr.mxu0 0.0
      %463 = vmatpush1.msra.mxu0 0.0
      %464 = vmatprep.subr.mxu0 0.0
      %465 = vmatpush1.msra.mxu0 0.0
      %466 = vmatprep.subr.mxu0 0.0
      %467 = vmatpush1.msra.mxu0 0.0
      %468 = vmatprep.subr.mxu0 0.0
      %469 = vmatpush1.msra.mxu0 0.0
      %470 = vmatprep.subr.mxu0 0.0
      %471 = vmatpush1.msra.mxu0 0.0
      %472 = vmatprep.subr.mxu0 0.0
      %473 = vmatpush1.msra.mxu0 0.0
      %474 = vmatprep.subr.mxu0 0.0
      %475 = vmatpush1.msra.mxu0 0.0
      %476 = vmatprep.subr.mxu0 0.0
      %477 = vmatpush1.msra.mxu0 0.0
      %478 = vmatprep.subr.mxu0 0.0
      %479 = vmatpush1.msra.mxu0 0.0
      %480 = vmatprep.subr.mxu0 0.0
      %481 = vmatpush1.msra.mxu0 0.0
      %482 = vmatprep.subr.mxu0 0.0
      %483 = vmatpush1.msra.mxu0 0.0
      %484 = vmatprep.subr.mxu0 0.0
      %485 = vmatpush1.msra.mxu0 0.0
      %486 = vmatprep.mubr.f32.mxu0 0.0
      %487 = vmatmul.mubr.f32.gmra.mrb[0].mxu0 %v399
      %v488 = vpop.f32.mrb[0].mxu0
      %v489 = vadd.f32 0.0, %v488
      %v490 = vpop.f32.mrb[0].mxu0
      %491 = vmatprep.mubr.f32.mxu0 0.0
      %492 = vmatmul.mubr.f32.gmra.mrb[0].mxu0 %v402
      %v493 = vpop.f32.mrb[0].mxu0
      %v494 = vadd.f32 0.0, %v493
      %v495 = vpop.f32.mrb[0].mxu0
      %496 = vmatprep.mubr.f32.mxu0 0.0
      %497 = vmatmul.mubr.f32.gmra.mrb[0].mxu0 %v405
      %v498 = vpop.f32.mrb[0].mxu0
      %v499 = vadd.f32 0.0, %v498
      %v500 = vpop.f32.mrb[0].mxu0
      %501 = vmatprep.mubr.f32.mxu0 0.0
      %502 = vmatmul.mubr.f32.gmra.mrb[0].mxu0 %v408
      %v503 = vpop.f32.mrb[0].mxu0
      %v504 = vadd.f32 0.0, %v503
      %v505 = vpop.f32.mrb[0].mxu0
      %506 = vmatprep.mubr.f32.mxu0 0.0
      %507 = vmatmul.mubr.f32.gmra.mrb[0].mxu0 %v411
      %v508 = vpop.f32.mrb[0].mxu0
      %v509 = vadd.f32 0.0, %v508
      %v510 = vpop.f32.mrb[0].mxu0
      %511 = vmatprep.mubr.f32.mxu0 0.0
      %512 = vmatmul.mubr.f32.gmra.mrb[0].mxu0 %v414
      %v513 = vpop.f32.mrb[0].mxu0
      %v514 = vadd.f32 0.0, %v513
      %v515 = vpop.f32.mrb[0].mxu0
      %516 = vmatprep.mubr.f32.mxu0 0.0
      %517 = vmatmul.mubr.f32.gmra.mrb[0].mxu0 %v417
      %v518 = vpop.f32.mrb[0].mxu0
      %v519 = vadd.f32 0.0, %v518
      %v520 = vpop.f32.mrb[0].mxu0
      %521 = vmatprep.mubr.f32.mxu0 0.0
      %522 = vmatmul.mubr.f32.gmra.mrb[0].mxu0 %v420
      %v523 = vpop.f32.mrb[0].mxu0
      %v524 = vadd.f32 0.0, %v523
      %v525 = vpop.f32.mrb[0].mxu0
      %526 = vdwg.mxu0
      %v527 = vmul.f32 %v359, %v489
      %v528 = vmul.f32 %v364, %v494
      %v529 = vmul.f32 %v369, %v499
      %v530 = vmul.f32 %v374, %v504
      %v531 = vmul.f32 %v379, %v509
      %v532 = vmul.f32 %v384, %v514
      %v533 = vmul.f32 %v389, %v519
      %v534 = vmul.f32 %v394, %v524
      %v535 = vld [vmem:[%s4] sm:$0xff]
      %v536 = vld [vmem:[%s4 + $0x8] sm:$0xff]
      %v537 = vld [vmem:[%s4 + $0x10] sm:$0xff]
      %v538 = vld [vmem:[%s4 + $0x18] sm:$0xff]
      %v539 = vld [vmem:[%s4 + $0x20] sm:$0xff]
      %v540 = vld [vmem:[%s4 + $0x28] sm:$0xff]
      %v541 = vld [vmem:[%s4 + $0x30] sm:$0xff]
      %v542 = vld [vmem:[%s4 + $0x38] sm:$0xff]
      %vm543 = vcmask 523264
      %v545 = vsel %vm543, %v527, 0
      %v548 = vsel %vm543, %v528, 0
      %v551 = vsel %vm543, %v529, 0
      %v554 = vsel %vm543, %v530, 0
      %v557 = vsel %vm543, %v531, 0
      %v560 = vsel %vm543, %v532, 0
      %v563 = vsel %vm543, %v533, 0
      %v566 = vsel %vm543, %v534, 0
      %568 = vmatprep.subr.mxu0 0.0
      %569 = vmatpush1.msra.mxu0 %v535
      %570 = vmatprep.subr.mxu0 0.0
      %571 = vmatpush1.msra.mxu0 %v536
      %572 = vmatprep.subr.mxu0 0.0
      %573 = vmatpush1.msra.mxu0 %v537
      %574 = vmatprep.subr.mxu0 0.0
      %575 = vmatpush1.msra.mxu0 %v538
      %576 = vmatprep.subr.mxu0 0.0
      %577 = vmatpush1.msra.mxu0 %v539
      %578 = vmatprep.subr.mxu0 0.0
      %579 = vmatpush1.msra.mxu0 %v540
      %580 = vmatprep.subr.mxu0 0.0
      %581 = vmatpush1.msra.mxu0 %v541
      %582 = vmatprep.subr.mxu0 0.0
      %583 = vmatpush1.msra.mxu0 %v542
      %584 = vmatprep.subr.mxu0 0.0
      %585 = vmatpush1.msra.mxu0 0.0
      %586 = vmatprep.subr.mxu0 0.0
      %587 = vmatpush1.msra.mxu0 0.0
      %588 = vmatprep.subr.mxu0 0.0
      %589 = vmatpush1.msra.mxu0 0.0
      %590 = vmatprep.subr.mxu0 0.0
      %591 = vmatpush1.msra.mxu0 0.0
      %592 = vmatprep.subr.mxu0 0.0
      %593 = vmatpush1.msra.mxu0 0.0
      %594 = vmatprep.subr.mxu0 0.0
      %595 = vmatpush1.msra.mxu0 0.0
      %596 = vmatprep.subr.mxu0 0.0
      %597 = vmatpush1.msra.mxu0 0.0
      %598 = vmatprep.subr.mxu0 0.0
      %599 = vmatpush1.msra.mxu0 0.0
      %600 = vmatprep.subr.mxu0 0.0
      %601 = vmatpush1.msra.mxu0 0.0
      %602 = vmatprep.subr.mxu0 0.0
      %603 = vmatpush1.msra.mxu0 0.0
      %604 = vmatprep.subr.mxu0 0.0
      %605 = vmatpush1.msra.mxu0 0.0
      %606 = vmatprep.subr.mxu0 0.0
      %607 = vmatpush1.msra.mxu0 0.0
      %608 = vmatprep.subr.mxu0 0.0
      %609 = vmatpush1.msra.mxu0 0.0
      %610 = vmatprep.subr.mxu0 0.0
      %611 = vmatpush1.msra.mxu0 0.0
      %612 = vmatprep.subr.mxu0 0.0
      %613 = vmatpush1.msra.mxu0 0.0
      %614 = vmatprep.subr.mxu0 0.0
      %615 = vmatpush1.msra.mxu0 0.0
      %616 = vmatprep.subr.mxu0 0.0
      %617 = vmatpush1.msra.mxu0 0.0
      %618 = vmatprep.subr.mxu0 0.0
      %619 = vmatpush1.msra.mxu0 0.0
      %620 = vmatprep.subr.mxu0 0.0
      %621 = vmatpush1.msra.mxu0 0.0
      %622 = vmatprep.subr.mxu0 0.0
      %623 = vmatpush1.msra.mxu0 0.0
      %624 = vmatprep.subr.mxu0 0.0
      %625 = vmatpush1.msra.mxu0 0.0
      %626 = vmatprep.subr.mxu0 0.0
      %627 = vmatpush1.msra.mxu0 0.0
      %628 = vmatprep.subr.mxu0 0.0
      %629 = vmatpush1.msra.mxu0 0.0
      %630 = vmatprep.subr.mxu0 0.0
      %631 = vmatpush1.msra.mxu0 0.0
      %632 = vmatprep.mubr.f32.mxu0 0.0
      %633 = vmatmul.mubr.f32.gmra.mrb[0].mxu0 %v545
      %v634 = vpop.f32.mrb[0].mxu0
      %v635 = vadd.f32 0.0, %v634
      %v636 = vpop.f32.mrb[0].mxu0
      %637 = vmatprep.mubr.f32.mxu0 0.0
      %638 = vmatmul.mubr.f32.gmra.mrb[0].mxu0 %v548
      %v639 = vpop.f32.mrb[0].mxu0
      %v640 = vadd.f32 0.0, %v639
      %v641 = vpop.f32.mrb[0].mxu0
      %642 = vmatprep.mubr.f32.mxu0 0.0
      %643 = vmatmul.mubr.f32.gmra.mrb[0].mxu0 %v551
      %v644 = vpop.f32.mrb[0].mxu0
      %v645 = vadd.f32 0.0, %v644
      %v646 = vpop.f32.mrb[0].mxu0
      %647 = vmatprep.mubr.f32.mxu0 0.0
      %648 = vmatmul.mubr.f32.gmra.mrb[0].mxu0 %v554
      %v649 = vpop.f32.mrb[0].mxu0
      %v650 = vadd.f32 0.0, %v649
      %v651 = vpop.f32.mrb[0].mxu0
      %652 = vmatprep.mubr.f32.mxu0 0.0
      %653 = vmatmul.mubr.f32.gmra.mrb[0].mxu0 %v557
      %v654 = vpop.f32.mrb[0].mxu0
      %v655 = vadd.f32 0.0, %v654
      %v656 = vpop.f32.mrb[0].mxu0
      %657 = vmatprep.mubr.f32.mxu0 0.0
      %658 = vmatmul.mubr.f32.gmra.mrb[0].mxu0 %v560
      %v659 = vpop.f32.mrb[0].mxu0
      %v660 = vadd.f32 0.0, %v659
      %v661 = vpop.f32.mrb[0].mxu0
      %662 = vmatprep.mubr.f32.mxu0 0.0
      %663 = vmatmul.mubr.f32.gmra.mrb[0].mxu0 %v563
      %v664 = vpop.f32.mrb[0].mxu0
      %v665 = vadd.f32 0.0, %v664
      %v666 = vpop.f32.mrb[0].mxu0
      %667 = vmatprep.mubr.f32.mxu0 0.0
      %668 = vmatmul.mubr.f32.gmra.mrb[0].mxu0 %v566
      %v669 = vpop.f32.mrb[0].mxu0
      %v670 = vadd.f32 0.0, %v669
      %v671 = vpop.f32.mrb[0].mxu0
      %672 = vdwg.mxu0
      %vm673 = vcmask 130048
      %674 = vst.msk [vmem:[%s248] sm:$0xff] %vm673, %v635
      %675 = vst.msk [vmem:[%s248 + $0x8] sm:$0xff] %vm673, %v640
      %676 = vst.msk [vmem:[%s248 + $0x10] sm:$0xff] %vm673, %v645
      %677 = vst.msk [vmem:[%s248 + $0x18] sm:$0xff] %vm673, %v650
      %678 = vst.msk [vmem:[%s248 + $0x20] sm:$0xff] %vm673, %v655
      %679 = vst.msk [vmem:[%s248 + $0x28] sm:$0xff] %vm673, %v660
      %680 = vst.msk [vmem:[%s248 + $0x30] sm:$0xff] %vm673, %v665
      %681 = vst.msk [vmem:[%s248 + $0x38] sm:$0xff] %vm673, %v670
      %s682 = smul.u32 8, %s16
      %p683 = scmp.lt.s32.totalorder %s682, 31
      %s684 = scalar_select %p683, %s682, 31
      %s685 = smul.addr %s684, 8
      %s686 = scalar_lea.vmem %s5, %s685
      // Predicated region
      $region41: #{tpu_custom_call.1} parent=39 // pred_check
        %p687 = pneg %p149
      $region42: #{tpu_custom_call.1} parent=39 // pred_check_branch
        %689 = sbr.rel (%p687) target = $region44
      $region43: #{tpu_custom_call.1} parent=39 // pred_region
        %s690 = smul.u32 8, %s16
      $region44: #{tpu_custom_call.1} parent=39 // pred_fallthru
        _
    $region40: #{tpu_custom_call.1} parent=5 // pred_fallthru
      _
    %p691 = scmp.le.s32.totalorder 2, %s11
    // Predicated region
    $region45: #{tpu_custom_call.1} parent=5 // pred_check
      %p692 = pneg %p691
    $region46: #{tpu_custom_call.1} parent=5 // pred_check_branch
      %694 = sbr.rel (%p692) target = $region48
    $region47: #{tpu_custom_call.1} parent=5 // pred_region
      %s695 = ssub.s32 %s11, 2
      // Predicated region
      $region49: #{tpu_custom_call.1} parent=47 // pred_check
        %p696 = pneg %p155
      $region50: #{tpu_custom_call.1} parent=47 // pred_check_branch
        %698 = sbr.rel (%p696) target = $region52
      $region51: #{tpu_custom_call.1} parent=47 // pred_region
        %s699 = smul.u32 8, %s17
        %p700 = scmp.lt.s32.totalorder %s699, 31
        %s701 = scalar_select %p700, %s699, 31
        %s702 = smul.addr %s701, 8
        %s703 = scalar_lea.vmem %s5, %s702
      $region52: #{tpu_custom_call.1} parent=47 // pred_fallthru
        _
    $region48: #{tpu_custom_call.1} parent=5 // pred_fallthru
      _
  $region6: #{tpu_custom_call.1} parent=0 // loop_footer
    %s15 = sadd.s32 1, %s11
  $region7: #{tpu_custom_call.1} parent=0 // loop_footer_branch
    %10 = sbr.rel target = $region3
  $region8: #{tpu_custom_call.1} parent=0 // loop_exit
    _

</llo_original>
